<compile_context>
chip_gen: v7x
topology: tpu7x:2x2x1
jax: 0.10.0
libtpu: 0.0.40
codegen_flags: <defaults>
</compile_context>

<pallas_src>
import numpy as np
import jax
import jax.numpy as jnp
from jax.experimental import pallas as pl
from jax.experimental.pallas import tpu as pltpu


def _coupling_kernel(yT_ref, fT_ref, w1yT_ref, w1fT_ref, b1T_ref, w2T_ref,
                     b2T_ref, maskT_ref, xT_ref, ldjT_ref):
    # Feature-major layout: M (= B*N) rides the lane axis, so all VPU/EUP ops
    # and the output stores are lane-dense.
    yT = yT_ref[...].astype(jnp.float32)      # (D, TM)
    fT = fT_ref[...].astype(jnp.float32)      # (F, TM)
    maskT = maskT_ref[...]                    # (D, 1), broadcast over lanes

    # map_st: 2-layer MLP + sigmoid.  Masked-select folded into zero rows of
    # the embedded first-layer weight.
    h = jnp.dot(w1yT_ref[...], jnp.tanh(yT), preferred_element_type=jnp.float32)
    h = h + jnp.dot(w1fT_ref[...], fT, preferred_element_type=jnp.float32)
    h = jnp.maximum(h + b1T_ref[...], 0.0)                                # (H, TM)
    st = jnp.dot(w2T_ref[...], h, preferred_element_type=jnp.float32)
    st = jax.nn.sigmoid(st + b2T_ref[...])                                # (2, TM)

    s = 5.0 * st[0:1, :] + 0.005              # (1, TM)
    t = st[1:2, :] * 6.0 - 3.0                # (1, TM)
    inv_s = pl.reciprocal(s, approx=False)    # one reciprocal row, mul over D rows

    xT = maskT * yT + (1.0 - maskT) * ((yT - t) * inv_s)                  # (D, TM)
    xT_ref[...] = xT.astype(xT_ref.dtype)
    ldjT_ref[...] = -s                        # sum over size-1 coupling dim == -s


def prepare_coupling_params(mask, w1, b1, w2, b2):
    """One-time host-side preprocessing (hoisted out of the traced forward).

    Embeds the masked-select into zero-padded rows of W1 and pre-transposes all
    parameters for the feature-major (feature, M) kernel layout.  Requires a
    concrete mask (runs in numpy, never under jit).
    """
    mask_np = np.asarray(mask, dtype=np.float32).reshape(-1)
    D = mask_np.shape[0]
    idx = np.nonzero(mask_np > 0.5)[0]
    K = idx.shape[0]
    w1_np = np.asarray(w1, dtype=np.float32)
    H = w1_np.shape[-1]
    w1y = np.zeros((D, H), dtype=np.float32)
    w1y[idx] = w1_np[:K]                      # rows for masked-in coordinates
    w1f = w1_np[K:]                           # rows for t_feat
    return dict(
        w1yT=jnp.asarray(np.ascontiguousarray(w1y.T)),              # (H, D)
        w1fT=jnp.asarray(np.ascontiguousarray(w1f.T)),              # (H, F)
        b1T=jnp.asarray(np.asarray(b1, np.float32).reshape(H, 1)),  # (H, 1)
        w2T=jnp.asarray(np.ascontiguousarray(
            np.asarray(w2, np.float32).T)),                         # (2, H)
        b2T=jnp.asarray(np.asarray(b2, np.float32).reshape(2, 1)),  # (2, 1)
        maskT=jnp.asarray(mask_np.reshape(D, 1)),                   # (D, 1)
    )


def coupling_forward(y, t_feat, params, *, io_dtype=jnp.float32,
                     desired_tile_m=4096):
    """y: [B, N, D], t_feat: [B, N, F].  Returns (x [B, N, D], ldj [B, N])."""
    B, N, D = y.shape
    F = t_feat.shape[-1]
    H = params["w1yT"].shape[0]
    M = B * N

    # --- tile selection along M (lane axis) --------------------------------
    # Big tiles amortize the ~0.35us per-grid-step overhead; keep >= 2 grid
    # steps when possible so both TensorCores get work on v7x.
    m128 = ((M + 127) // 128) * 128
    if m128 >= 256:
        tile_m = max(128, min(desired_tile_m, (m128 // 2) // 128 * 128))
    else:
        tile_m = m128
    Mp = ((M + tile_m - 1) // tile_m) * tile_m        # zero-pad tail columns
    grid = (Mp // tile_m,)

    # --- explicit VMEM budget (v7x only has 64 MiB physical) ---------------
    io_bytes = jnp.dtype(io_dtype).itemsize
    stream_bytes = 2 * tile_m * ((D + F + D) * io_bytes + 4)  # dbl-buf y, f, x, ldj
    weight_bytes = 4 * (H * 128 + H * max(F, 128) + H + 2 * H + 2 + D) * 2
    vmem_limit = int(min(max(2 * stream_bytes + weight_bytes + (4 << 20),
                             16 << 20), 48 << 20))

    # --- feature-major layout: (feature, M) so M rides the lanes ------------
    yT = jnp.transpose(y.reshape(M, D)).astype(io_dtype)       # (D, M)
    fT = jnp.transpose(t_feat.reshape(M, F)).astype(io_dtype)  # (F, M)
    if Mp != M:
        yT = jnp.pad(yT, ((0, 0), (0, Mp - M)))
        fT = jnp.pad(fT, ((0, 0), (0, Mp - M)))

    col_spec = lambda rows: pl.BlockSpec((rows, tile_m), lambda i: (0, i))
    resident = lambda r, c: pl.BlockSpec((r, c), lambda i: (0, 0))

    xT, ldjT = pl.pallas_call(
        _coupling_kernel,
        out_shape=(jax.ShapeDtypeStruct((D, Mp), io_dtype),
                   jax.ShapeDtypeStruct((1, Mp), jnp.float32)),
        grid=grid,
        in_specs=[
            col_spec(D),            # yT
            col_spec(F),            # featT
            resident(H, D),         # w1yT (zero-embedded masked select)
            resident(H, F),         # w1fT
            resident(H, 1),         # b1T
            resident(2, H),         # w2T
            resident(2, 1),         # b2T
            resident(D, 1),         # maskT
        ],
        out_specs=(col_spec(D), col_spec(1)),
        compiler_params=pltpu.CompilerParams(
            dimension_semantics=("parallel",),
            vmem_limit_bytes=vmem_limit),
    )(yT, fT, params["w1yT"], params["w1fT"], params["b1T"],
      params["w2T"], params["b2T"], params["maskT"])

    x = jnp.transpose(xT[:, :M]).reshape(B, N, D)
    ldj = ldjT[0, :M].reshape(B, N)
    return x, ldj


def coupling_forward_ref(y, t_feat, mask, w1, b1, w2, b2):
    """Pure-JAX reference mirroring the PyTorch forward exactly."""
    mask_bool = np.asarray(mask).astype(bool)
    y1 = y * mask
    h = jnp.tanh(y[..., mask_bool])
    hin = jnp.concatenate([h, t_feat], axis=-1)
    hid = jnp.maximum(hin @ w1 + b1, 0.0)
    st = jax.nn.sigmoid(hid @ w2 + b2)
    s, t = st[..., 0:1], st[..., 1:2]
    s = 5.0 * s + 0.005
    t = t * 6.0 - 3.0
    x = y1 + (1.0 - mask) * ((y - t) / s)
    ldj = (-s).sum(-1)
    return x, ldj


if __name__ == "__main__":
    # Small deterministic shapes: B=2, N=128 points, D=4 coupled dims,
    # F=32 conditioning features, H=32 hidden units.
    B, N, D, F, H = 2, 128, 4, 32, 32
    mask = jnp.array([1.0, 0.0, 1.0, 0.0], dtype=jnp.float32)   # K = 2 masked-in
    K = 2

    key = jax.random.PRNGKey(0)
    k_y, k_f, k_w1, k_b1, k_w2, k_b2 = jax.random.split(key, 6)
    y = jax.random.normal(k_y, (B, N, D), jnp.float32)
    t_feat = jax.random.normal(k_f, (B, N, F), jnp.float32)
    w1 = jax.random.normal(k_w1, (K + F, H), jnp.float32) * 0.1
    b1 = jax.random.normal(k_b1, (H,), jnp.float32) * 0.1
    w2 = jax.random.normal(k_w2, (H, 2), jnp.float32) * 0.1
    b2 = jax.random.normal(k_b2, (2,), jnp.float32) * 0.1

    # One-time preprocessing (outside any traced path).
    params = prepare_coupling_params(mask, w1, b1, w2, b2)

    # Run the Pallas kernel once (f32 HBM I/O, faithful to module precision).
    x, ldj = coupling_forward(y, t_feat, params, io_dtype=jnp.float32)
    jax.block_until_ready((x, ldj))

    # Correctness vs. pure-JAX reference of the PyTorch forward.
    x_ref, ldj_ref = coupling_forward_ref(y, t_feat, mask, w1, b1, w2, b2)
    assert x.shape == (B, N, D) and ldj.shape == (B, N)
    assert jnp.allclose(x, x_ref, atol=1e-5, rtol=1e-4)
    assert jnp.allclose(ldj, ldj_ref, atol=1e-5, rtol=1e-4)

    print("KERNEL_OK")
</pallas_src>

<mosaic_0001>
module attributes {stable_mosaic.version = 11 : i64} {
  func.func @_coupling_kernel(%arg0: i32, %arg1: memref<4x128xf32, #tpu.memory_space<vmem>>, %arg2: memref<32x128xf32, #tpu.memory_space<vmem>>, %arg3: memref<32x4xf32, #tpu.memory_space<vmem>>, %arg4: memref<32x32xf32, #tpu.memory_space<vmem>>, %arg5: memref<32x1xf32, #tpu.memory_space<vmem>>, %arg6: memref<2x32xf32, #tpu.memory_space<vmem>>, %arg7: memref<2x1xf32, #tpu.memory_space<vmem>>, %arg8: memref<4x1xf32, #tpu.memory_space<vmem>>, %arg9: memref<4x128xf32, #tpu.memory_space<vmem>>, %arg10: memref<1x128xf32, #tpu.memory_space<vmem>>) attributes {dimension_semantics = [#tpu.dimension_semantics<parallel>], iteration_bounds = array<i64: 2>, scalar_prefetch = 0 : i64, scratch_operands = 0 : i64, tpu.core_type = #tpu.core_type<tc>, window_params = [{transform_indices = @transform_0, window_bounds = array<i64: 4, 128>}, {transform_indices = @transform_1, window_bounds = array<i64: 32, 128>}, {pipeline_mode = #tpu.pipeline_mode<synchronous>, transform_indices = @transform_2, window_bounds = array<i64: 32, 4>}, {pipeline_mode = #tpu.pipeline_mode<synchronous>, transform_indices = @transform_3, window_bounds = array<i64: 32, 32>}, {pipeline_mode = #tpu.pipeline_mode<synchronous>, transform_indices = @transform_4, window_bounds = array<i64: 32, 1>}, {pipeline_mode = #tpu.pipeline_mode<synchronous>, transform_indices = @transform_5, window_bounds = array<i64: 2, 32>}, {pipeline_mode = #tpu.pipeline_mode<synchronous>, transform_indices = @transform_6, window_bounds = array<i64: 2, 1>}, {pipeline_mode = #tpu.pipeline_mode<synchronous>, transform_indices = @transform_7, window_bounds = array<i64: 4, 1>}, {transform_indices = @transform_8, window_bounds = array<i64: 4, 128>}, {transform_indices = @transform_9, window_bounds = array<i64: 1, 128>}]} {
    %c0 = arith.constant 0 : index
    %c0_0 = arith.constant 0 : index
    %0 = vector.load %arg1[%c0, %c0_0] : memref<4x128xf32, #tpu.memory_space<vmem>>, vector<4x128xf32>
    %c0_1 = arith.constant 0 : index
    %c0_2 = arith.constant 0 : index
    %1 = vector.load %arg2[%c0_1, %c0_2] : memref<32x128xf32, #tpu.memory_space<vmem>>, vector<32x128xf32>
    %c0_3 = arith.constant 0 : index
    %c0_4 = arith.constant 0 : index
    %2 = vector.load %arg8[%c0_3, %c0_4] : memref<4x1xf32, #tpu.memory_space<vmem>>, vector<4x1xf32>
    %c0_5 = arith.constant 0 : index
    %c0_6 = arith.constant 0 : index
    %3 = vector.load %arg3[%c0_5, %c0_6] : memref<32x4xf32, #tpu.memory_space<vmem>>, vector<32x4xf32>
    %4 = math.tanh %0 : vector<4x128xf32>
    %cst = arith.constant dense<0.000000e+00> : vector<32x128xf32>
    %5 = tpu.matmul %3, %4, %cst {dimension_numbers = #tpu.dot_dimension_numbers<[1], [0], [0], [1], [0, 0, 1, 1], [], []>} : vector<32x4xf32>, vector<4x128xf32>, vector<32x128xf32> -> vector<32x128xf32>
    %c0_7 = arith.constant 0 : index
    %c0_8 = arith.constant 0 : index
    %6 = vector.load %arg4[%c0_7, %c0_8] : memref<32x32xf32, #tpu.memory_space<vmem>>, vector<32x32xf32>
    %cst_9 = arith.constant dense<0.000000e+00> : vector<32x128xf32>
    %7 = tpu.matmul %6, %1, %cst_9 {dimension_numbers = #tpu.dot_dimension_numbers<[1], [0], [0], [1], [0, 0, 1, 1], [], []>} : vector<32x32xf32>, vector<32x128xf32>, vector<32x128xf32> -> vector<32x128xf32>
    %8 = arith.addf %5, %7 : vector<32x128xf32>
    %c0_10 = arith.constant 0 : index
    %c0_11 = arith.constant 0 : index
    %9 = vector.load %arg5[%c0_10, %c0_11] : memref<32x1xf32, #tpu.memory_space<vmem>>, vector<32x1xf32>
    %10 = vector.broadcast %9 : vector<32x1xf32> to vector<32x128xf32>
    %11 = arith.addf %8, %10 : vector<32x128xf32>
    %cst_12 = arith.constant 0.000000e+00 : f32
    %12 = vector.broadcast %cst_12 : f32 to vector<32x128xf32>
    %13 = arith.maximumf %11, %12 : vector<32x128xf32>
    %c0_13 = arith.constant 0 : index
    %c0_14 = arith.constant 0 : index
    %14 = vector.load %arg6[%c0_13, %c0_14] : memref<2x32xf32, #tpu.memory_space<vmem>>, vector<2x32xf32>
    %cst_15 = arith.constant dense<0.000000e+00> : vector<2x128xf32>
    %15 = tpu.matmul %14, %13, %cst_15 {dimension_numbers = #tpu.dot_dimension_numbers<[1], [0], [0], [1], [0, 0, 1, 1], [], []>} : vector<2x32xf32>, vector<32x128xf32>, vector<2x128xf32> -> vector<2x128xf32>
    %c0_16 = arith.constant 0 : index
    %c0_17 = arith.constant 0 : index
    %16 = vector.load %arg7[%c0_16, %c0_17] : memref<2x1xf32, #tpu.memory_space<vmem>>, vector<2x1xf32>
    %17 = vector.broadcast %16 : vector<2x1xf32> to vector<2x128xf32>
    %18 = arith.addf %15, %17 : vector<2x128xf32>
    %19 = arith.negf %18 : vector<2x128xf32>
    %20 = math.exp %19 : vector<2x128xf32>
    %cst_18 = arith.constant 1.000000e+00 : f32
    %21 = vector.broadcast %cst_18 : f32 to vector<2x128xf32>
    %22 = arith.addf %21, %20 : vector<2x128xf32>
    %23 = arith.divf %21, %22 : vector<2x128xf32>
    %24 = vector.extract_strided_slice %23 {offsets = [0, 0], sizes = [1, 128], strides = [1, 1]} : vector<2x128xf32> to vector<1x128xf32>
    %cst_19 = arith.constant 5.000000e+00 : f32
    %25 = vector.broadcast %cst_19 : f32 to vector<1x128xf32>
    %26 = arith.mulf %25, %24 : vector<1x128xf32>
    %cst_20 = arith.constant 5.000000e-03 : f32
    %27 = vector.broadcast %cst_20 : f32 to vector<1x128xf32>
    %28 = arith.addf %26, %27 : vector<1x128xf32>
    %29 = vector.extract_strided_slice %23 {offsets = [1, 0], sizes = [1, 128], strides = [1, 1]} : vector<2x128xf32> to vector<1x128xf32>
    %cst_21 = arith.constant 6.000000e+00 : f32
    %30 = vector.broadcast %cst_21 : f32 to vector<1x128xf32>
    %31 = arith.mulf %29, %30 : vector<1x128xf32>
    %cst_22 = arith.constant 3.000000e+00 : f32
    %32 = vector.broadcast %cst_22 : f32 to vector<1x128xf32>
    %33 = arith.subf %31, %32 : vector<1x128xf32>
    %34 = tpu.reciprocal %28 : vector<1x128xf32> -> vector<1x128xf32>
    %35 = vector.broadcast %2 : vector<4x1xf32> to vector<4x128xf32>
    %36 = arith.mulf %35, %0 : vector<4x128xf32>
    %cst_23 = arith.constant 1.000000e+00 : f32
    %37 = vector.broadcast %cst_23 : f32 to vector<4x1xf32>
    %38 = arith.subf %37, %2 : vector<4x1xf32>
    %39 = vector.broadcast %33 : vector<1x128xf32> to vector<4x128xf32>
    %40 = arith.subf %0, %39 : vector<4x128xf32>
    %41 = vector.broadcast %34 : vector<1x128xf32> to vector<4x128xf32>
    %42 = arith.mulf %40, %41 : vector<4x128xf32>
    %43 = vector.broadcast %38 : vector<4x1xf32> to vector<4x128xf32>
    %44 = arith.mulf %43, %42 : vector<4x128xf32>
    %45 = arith.addf %36, %44 : vector<4x128xf32>
    %c0_24 = arith.constant 0 : index
    %c0_25 = arith.constant 0 : index
    %46 = vector.load %arg9[%c0_24, %c0_25] : memref<4x128xf32, #tpu.memory_space<vmem>>, vector<4x128xf32>
    tpu.vector_store %arg9[%c0_24, %c0_25], %45 {strides = array<i32>} : memref<4x128xf32, #tpu.memory_space<vmem>>, vector<4x128xf32>,
    %cst_26 = arith.constant 0.000000e+00 : f32
    %47 = vector.broadcast %cst_26 : f32 to vector<1x128xf32>
    %48 = arith.subf %47, %28 : vector<1x128xf32>
    %c0_27 = arith.constant 0 : index
    %c0_28 = arith.constant 0 : index
    %49 = vector.load %arg10[%c0_27, %c0_28] : memref<1x128xf32, #tpu.memory_space<vmem>>, vector<1x128xf32>
    tpu.vector_store %arg10[%c0_27, %c0_28], %48 {strides = array<i32>} : memref<1x128xf32, #tpu.memory_space<vmem>>, vector<1x128xf32>,
    return
  }
  func.func @transform_0(%arg0: i32) -> (i32, i32) {
    %c0_i32 = arith.constant 0 : i32
    %c0_i32_0 = arith.constant 0 : i32
    return %c0_i32, %arg0 : i32, i32
  }
  func.func @transform_1(%arg0: i32) -> (i32, i32) {
    %c0_i32 = arith.constant 0 : i32
    %c0_i32_0 = arith.constant 0 : i32
    return %c0_i32, %arg0 : i32, i32
  }
  func.func @transform_2(%arg0: i32) -> (i32, i32) {
    %c0_i32 = arith.constant 0 : i32
    %c0_i32_0 = arith.constant 0 : i32
    %c0_i32_1 = arith.constant 0 : i32
    return %c0_i32, %c0_i32_0 : i32, i32
  }
  func.func @transform_3(%arg0: i32) -> (i32, i32) {
    %c0_i32 = arith.constant 0 : i32
    %c0_i32_0 = arith.constant 0 : i32
    %c0_i32_1 = arith.constant 0 : i32
    return %c0_i32, %c0_i32_0 : i32, i32
  }
  func.func @transform_4(%arg0: i32) -> (i32, i32) {
    %c0_i32 = arith.constant 0 : i32
    %c0_i32_0 = arith.constant 0 : i32
    %c0_i32_1 = arith.constant 0 : i32
    return %c0_i32, %c0_i32_0 : i32, i32
  }
  func.func @transform_5(%arg0: i32) -> (i32, i32) {
    %c0_i32 = arith.constant 0 : i32
    %c0_i32_0 = arith.constant 0 : i32
    %c0_i32_1 = arith.constant 0 : i32
    return %c0_i32, %c0_i32_0 : i32, i32
  }
  func.func @transform_6(%arg0: i32) -> (i32, i32) {
    %c0_i32 = arith.constant 0 : i32
    %c0_i32_0 = arith.constant 0 : i32
    %c0_i32_1 = arith.constant 0 : i32
    return %c0_i32, %c0_i32_0 : i32, i32
  }
  func.func @transform_7(%arg0: i32) -> (i32, i32) {
    %c0_i32 = arith.constant 0 : i32
    %c0_i32_0 = arith.constant 0 : i32
    %c0_i32_1 = arith.constant 0 : i32
    return %c0_i32, %c0_i32_0 : i32, i32
  }
  func.func @transform_8(%arg0: i32) -> (i32, i32) {
    %c0_i32 = arith.constant 0 : i32
    %c0_i32_0 = arith.constant 0 : i32
    return %c0_i32, %arg0 : i32, i32
  }
  func.func @transform_9(%arg0: i32) -> (i32, i32) {
    %c0_i32 = arith.constant 0 : i32
    %c0_i32_0 = arith.constant 0 : i32
    return %c0_i32, %arg0 : i32, i32
  }
}

</mosaic_0001>

<llo_original>
// kernel: tpu_custom_call.1
$region0: #{tpu_custom_call.1}
  #allocation0 [shape = 'u32[]', space=smem, size = 0x4, offset = 0x4, fixed_abs, tag = 'smem constant byte address 0x4 - core index']
  #allocation1 [shape = 'u32[144,128]{1,0:T(1,128)}', space=vmem, size = 0x12000, scoped, tag = 'internal scratch']
  %s0 = inlined_call_operand.vmem [shape: f32[4,256], index: 0, kind: input, shape index: {}]
  %s1 = inlined_call_operand.vmem [shape: f32[32,256], index: 1, kind: input, shape index: {}]
  %s2 = inlined_call_operand.vmem [shape: f32[32,4], index: 2, kind: input, shape index: {}]
  %s3 = inlined_call_operand.hbm [shape: f32[32,32], index: 3, kind: input, shape index: {}]
  %s4 = inlined_call_operand.vmem [shape: f32[32,1], index: 4, kind: input, shape index: {}]
  %s5 = inlined_call_operand.vmem [shape: f32[2,32], index: 5, kind: input, shape index: {}]
  %s6 = inlined_call_operand.vmem [shape: f32[2,1], index: 6, kind: input, shape index: {}]
  %s7 = inlined_call_operand.vmem [shape: f32[4,1], index: 7, kind: input, shape index: {}]
  %s8 = inlined_call_operand.hbm [shape: f32[4,256], index: 8, kind: output, shape index: {0}]
  %s9 = inlined_call_operand.hbm [shape: f32[1,256], index: 9, kind: output, shape index: {1}]
  %10 = xla_tuple %s8, %s9
  %s11 = sld [smem:[#allocation0]]
  $region115: #{tpu_custom_call.1} parent=0
    _
  %s13 = ssub.s32 1, %s11
  %s14 = scalar_select 0, %s13, %s11
  $region1: #{tpu_custom_call.1} parent=0
    #allocation2 [shape = 'u8[32768]{0}', space=vmem, size = 0x8000, scoped, tag = 'input window, operand 1']
    #allocation3 [shape = 'u8[16384]{0}', space=vmem, size = 0x4000, scoped, tag = 'input window, operand 3, single buffered']
    #allocation4 [shape = 's32[2]{0}', space=sflag, size = 0x8, scoped, tag = 'scoped memory for tpu_custom_call.1']
    #allocation5 [shape = 's32[2]{0}', space=sflag, size = 0x8, scoped, tag = 'scoped memory for tpu_custom_call.1']
    #allocation6 [shape = 'u8[4096]{0}', space=vmem, size = 0x1000, scoped, tag = 'output window, operand 0']
    #allocation7 [shape = 'u8[1024]{0}', space=vmem, size = 0x400, scoped, tag = 'output window, operand 1']
    #allocation8 [shape = 's32[2]{0}', space=sflag, size = 0x8, scoped, tag = 'scoped memory for tpu_custom_call.1']
    %15 = vsyncpa [#allocation4], 0
    %16 = vsyncpa [#allocation5], 0
    %s17 = scalar_lea.sflag [#allocation5], 1
    %18 = vsyncpa %s17, 0
    %19 = vsyncpa [#allocation8], 0
    %s20 = scalar_lea.sflag [#allocation8], 1
    %21 = vsyncpa %s20, 0
    loop: start=0, step=1, limit=4
    $region2: #{tpu_custom_call.1} parent=1 // loop_pre_header
      _
    $region3: #{tpu_custom_call.1} parent=1 // loop_header
      %s23 = sphi 0, %s27
      %p24 = scmp.ge.s32.totalorder %s23, 4
      %s33 = sphi 0, %s35
      %s36 = sphi 0, %s33
      %s37 = sphi 0, %s36
      %s53 = sphi 0, %s37
      %s59 = sphi 0, %s61
      %s62 = sphi 0, %s59
      %s63 = sphi 0, %s62
      %s79 = sphi 0, %s63
      %s83 = sphi 0, %s83
      %s85 = sphi 0, %s83
      %s86 = sphi 0, %s85
      %s100 = sphi 0, %s86
      %s104 = sphi 0, %s104
      %s106 = sphi 0, %s104
      %s107 = sphi 0, %s106
      %s121 = sphi 0, %s107
      %s125 = sphi 0, %s125
      %s127 = sphi 0, %s125
      %s128 = sphi 0, %s127
      %s142 = sphi 0, %s128
      %s146 = sphi 0, %s146
      %s148 = sphi 0, %s146
      %s149 = sphi 0, %s148
      %s163 = sphi 0, %s149
      %s167 = sphi 0, %s167
      %s169 = sphi 0, %s167
      %s170 = sphi 0, %s169
      %s184 = sphi 0, %s170
      %s188 = sphi 0, %s188
      %s190 = sphi 0, %s188
      %s191 = sphi 0, %s190
      %s205 = sphi 0, %s191
      %s211 = sphi 0, %s213
      %s214 = sphi 0, %s211
      %s215 = sphi 0, %s214
      %s231 = sphi 0, %s215
      %s237 = sphi 0, %s239
      %s240 = sphi 0, %s237
      %s241 = sphi 0, %s240
      %s257 = sphi 0, %s241
    $region4: #{tpu_custom_call.1} parent=1 // loop_header_branch
      %26 = sbr.rel (%p24) target = $region8
    $region5: #{tpu_custom_call.1} parent=1 // loop_body
      %s28 = ssub.s32 %s23, 1
      %s29 = ssub.s32 %s23, 2
      %s30 = sadd.s32 %s23, 1
      %s31 = ssub.s32 %s23, %s30
      %p32 = scmp.eq.s32.totalorder %s31, 0
      %s34 = sadd.s32 %s33, 1
      %s35 = scalar_select %p32, %s33, %s34
      %p38 = pneg %p32
      %p39 = scmp.eq.s32.totalorder %s23, 1
      %p40 = por %p38, %p39
      %p41 = scmp.ne.s32.totalorder %s33, %s36
      %p42 = scmp.eq.s32.totalorder %s23, 0
      %p43 = por %p41, %p42
      %p44 = scmp.ne.s32.totalorder %s33, %s36
      %p45 = scmp.eq.s32.totalorder %s28, 1
      %p46 = por %p44, %p45
      %p47 = scmp.ne.s32.totalorder %s36, %s37
      %p48 = scmp.eq.s32.totalorder %s28, 0
      %p49 = por %p47, %p48
      %p50 = scmp.ne.s32.totalorder %s36, %s37
      %p51 = scmp.eq.s32.totalorder %s29, 1
      %p52 = por %p50, %p51
      %p54 = scmp.ne.s32.totalorder %s37, %s53
      %p55 = scmp.eq.s32.totalorder %s29, 0
      %p56 = por %p54, %p55
      %s57 = ssub.s32 %s23, %s30
      %p58 = scmp.eq.s32.totalorder %s57, 0
      %s60 = sadd.s32 %s59, 1
      %s61 = scalar_select %p58, %s59, %s60
      %p64 = pneg %p58
      %p65 = scmp.eq.s32.totalorder %s23, 1
      %p66 = por %p64, %p65
      %p67 = scmp.ne.s32.totalorder %s59, %s62
      %p68 = scmp.eq.s32.totalorder %s23, 0
      %p69 = por %p67, %p68
      %p70 = scmp.ne.s32.totalorder %s59, %s62
      %p71 = scmp.eq.s32.totalorder %s28, 1
      %p72 = por %p70, %p71
      %p73 = scmp.ne.s32.totalorder %s62, %s63
      %p74 = scmp.eq.s32.totalorder %s28, 0
      %p75 = por %p73, %p74
      %p76 = scmp.ne.s32.totalorder %s62, %s63
      %p77 = scmp.eq.s32.totalorder %s29, 1
      %p78 = por %p76, %p77
      %p80 = scmp.ne.s32.totalorder %s63, %s79
      %p81 = scmp.eq.s32.totalorder %s29, 0
      %p82 = por %p80, %p81
      %s84 = sadd.s32 %s83, 1
      %p87 = scmp.eq.s32.totalorder %s23, 1
      %p88 = scmp.ne.s32.totalorder %s83, %s85
      %p89 = scmp.eq.s32.totalorder %s23, 0
      %p90 = por %p88, %p89
      %p91 = scmp.ne.s32.totalorder %s83, %s85
      %p92 = scmp.eq.s32.totalorder %s28, 1
      %p93 = por %p91, %p92
      %p94 = scmp.ne.s32.totalorder %s85, %s86
      %p95 = scmp.eq.s32.totalorder %s28, 0
      %p96 = por %p94, %p95
      %p97 = scmp.ne.s32.totalorder %s85, %s86
      %p98 = scmp.eq.s32.totalorder %s29, 1
      %p99 = por %p97, %p98
      %p101 = scmp.ne.s32.totalorder %s86, %s100
      %p102 = scmp.eq.s32.totalorder %s29, 0
      %p103 = por %p101, %p102
      %s105 = sadd.s32 %s104, 1
      %p108 = scmp.eq.s32.totalorder %s23, 1
      %p109 = scmp.ne.s32.totalorder %s104, %s106
      %p110 = scmp.eq.s32.totalorder %s23, 0
      %p111 = por %p109, %p110
      %p112 = scmp.ne.s32.totalorder %s104, %s106
      %p113 = scmp.eq.s32.totalorder %s28, 1
      %p114 = por %p112, %p113
      %p115 = scmp.ne.s32.totalorder %s106, %s107
      %p116 = scmp.eq.s32.totalorder %s28, 0
      %p117 = por %p115, %p116
      %p118 = scmp.ne.s32.totalorder %s106, %s107
      %p119 = scmp.eq.s32.totalorder %s29, 1
      %p120 = por %p118, %p119
      %p122 = scmp.ne.s32.totalorder %s107, %s121
      %p123 = scmp.eq.s32.totalorder %s29, 0
      %p124 = por %p122, %p123
      %s126 = sadd.s32 %s125, 1
      %p129 = scmp.eq.s32.totalorder %s23, 1
      %p130 = scmp.ne.s32.totalorder %s125, %s127
      %p131 = scmp.eq.s32.totalorder %s23, 0
      %p132 = por %p130, %p131
      %p133 = scmp.ne.s32.totalorder %s125, %s127
      %p134 = scmp.eq.s32.totalorder %s28, 1
      %p135 = por %p133, %p134
      %p136 = scmp.ne.s32.totalorder %s127, %s128
      %p137 = scmp.eq.s32.totalorder %s28, 0
      %p138 = por %p136, %p137
      %p139 = scmp.ne.s32.totalorder %s127, %s128
      %p140 = scmp.eq.s32.totalorder %s29, 1
      %p141 = por %p139, %p140
      %p143 = scmp.ne.s32.totalorder %s128, %s142
      %p144 = scmp.eq.s32.totalorder %s29, 0
      %p145 = por %p143, %p144
      %s147 = sadd.s32 %s146, 1
      %p150 = scmp.eq.s32.totalorder %s23, 1
      %p151 = scmp.ne.s32.totalorder %s146, %s148
      %p152 = scmp.eq.s32.totalorder %s23, 0
      %p153 = por %p151, %p152
      %p154 = scmp.ne.s32.totalorder %s146, %s148
      %p155 = scmp.eq.s32.totalorder %s28, 1
      %p156 = por %p154, %p155
      %p157 = scmp.ne.s32.totalorder %s148, %s149
      %p158 = scmp.eq.s32.totalorder %s28, 0
      %p159 = por %p157, %p158
      %p160 = scmp.ne.s32.totalorder %s148, %s149
      %p161 = scmp.eq.s32.totalorder %s29, 1
      %p162 = por %p160, %p161
      %p164 = scmp.ne.s32.totalorder %s149, %s163
      %p165 = scmp.eq.s32.totalorder %s29, 0
      %p166 = por %p164, %p165
      %s168 = sadd.s32 %s167, 1
      %p171 = scmp.eq.s32.totalorder %s23, 1
      %p172 = scmp.ne.s32.totalorder %s167, %s169
      %p173 = scmp.eq.s32.totalorder %s23, 0
      %p174 = por %p172, %p173
      %p175 = scmp.ne.s32.totalorder %s167, %s169
      %p176 = scmp.eq.s32.totalorder %s28, 1
      %p177 = por %p175, %p176
      %p178 = scmp.ne.s32.totalorder %s169, %s170
      %p179 = scmp.eq.s32.totalorder %s28, 0
      %p180 = por %p178, %p179
      %p181 = scmp.ne.s32.totalorder %s169, %s170
      %p182 = scmp.eq.s32.totalorder %s29, 1
      %p183 = por %p181, %p182
      %p185 = scmp.ne.s32.totalorder %s170, %s184
      %p186 = scmp.eq.s32.totalorder %s29, 0
      %p187 = por %p185, %p186
      %s189 = sadd.s32 %s188, 1
      %p192 = scmp.eq.s32.totalorder %s23, 1
      %p193 = scmp.ne.s32.totalorder %s188, %s190
      %p194 = scmp.eq.s32.totalorder %s23, 0
      %p195 = por %p193, %p194
      %p196 = scmp.ne.s32.totalorder %s188, %s190
      %p197 = scmp.eq.s32.totalorder %s28, 1
      %p198 = por %p196, %p197
      %p199 = scmp.ne.s32.totalorder %s190, %s191
      %p200 = scmp.eq.s32.totalorder %s28, 0
      %p201 = por %p199, %p200
      %p202 = scmp.ne.s32.totalorder %s190, %s191
      %p203 = scmp.eq.s32.totalorder %s29, 1
      %p204 = por %p202, %p203
      %p206 = scmp.ne.s32.totalorder %s191, %s205
      %p207 = scmp.eq.s32.totalorder %s29, 0
      %p208 = por %p206, %p207
      %s209 = ssub.s32 %s23, %s30
      %p210 = scmp.eq.s32.totalorder %s209, 0
      %s212 = sadd.s32 %s211, 1
      %s213 = scalar_select %p210, %s211, %s212
      %p216 = pneg %p210
      %p217 = scmp.eq.s32.totalorder %s23, 1
      %p218 = por %p216, %p217
      %p219 = scmp.ne.s32.totalorder %s211, %s214
      %p220 = scmp.eq.s32.totalorder %s23, 0
      %p221 = por %p219, %p220
      %p222 = scmp.ne.s32.totalorder %s211, %s214
      %p223 = scmp.eq.s32.totalorder %s28, 1
      %p224 = por %p222, %p223
      %p225 = scmp.ne.s32.totalorder %s214, %s215
      %p226 = scmp.eq.s32.totalorder %s28, 0
      %p227 = por %p225, %p226
      %p228 = scmp.ne.s32.totalorder %s214, %s215
      %p229 = scmp.eq.s32.totalorder %s29, 1
      %p230 = por %p228, %p229
      %p232 = scmp.ne.s32.totalorder %s215, %s231
      %p233 = scmp.eq.s32.totalorder %s29, 0
      %p234 = por %p232, %p233
      %s235 = ssub.s32 %s23, %s30
      %p236 = scmp.eq.s32.totalorder %s235, 0
      %s238 = sadd.s32 %s237, 1
      %s239 = scalar_select %p236, %s237, %s238
      %p242 = pneg %p236
      %p243 = scmp.eq.s32.totalorder %s23, 1
      %p244 = por %p242, %p243
      %p245 = scmp.ne.s32.totalorder %s237, %s240
      %p246 = scmp.eq.s32.totalorder %s23, 0
      %p247 = por %p245, %p246
      %p248 = scmp.ne.s32.totalorder %s237, %s240
      %p249 = scmp.eq.s32.totalorder %s28, 1
      %p250 = por %p248, %p249
      %p251 = scmp.ne.s32.totalorder %s240, %s241
      %p252 = scmp.eq.s32.totalorder %s28, 0
      %p253 = por %p251, %p252
      %p254 = scmp.ne.s32.totalorder %s240, %s241
      %p255 = scmp.eq.s32.totalorder %s29, 1
      %p256 = por %p254, %p255
      %p258 = scmp.ne.s32.totalorder %s241, %s257
      %p259 = scmp.eq.s32.totalorder %s29, 0
      %p260 = por %p258, %p259
      %p261 = scmp.le.s32.totalorder 1, %s23
      %p262 = scmp.lt.s32.totalorder %s23, 3
      %p263 = pnand %p261, %p262
      %p264 = pneg %p263
      // Predicated region
      $region9: #{tpu_custom_call.1} parent=5 // pred_check
        _
      $region10: #{tpu_custom_call.1} parent=5 // pred_check_branch
        %266 = sbr.rel (%p263) target = $region12
      $region11: #{tpu_custom_call.1} parent=5 // pred_region
        %s267 = ssub.s32 %s23, 1
        // Predicated region
        $region13: #{tpu_custom_call.1} parent=11 // pred_check
          %p268 = pneg %p96
        $region14: #{tpu_custom_call.1} parent=11 // pred_check_branch
          %270 = sbr.rel (%p268) target = $region16
        $region15: #{tpu_custom_call.1} parent=11 // pred_region
          _
        $region16: #{tpu_custom_call.1} parent=11 // pred_fallthru
          _
        // Predicated region
        $region17: #{tpu_custom_call.1} parent=11 // pred_check
          %p271 = pneg %p117
        $region18: #{tpu_custom_call.1} parent=11 // pred_check_branch
          %273 = sbr.rel (%p271) target = $region20
        $region19: #{tpu_custom_call.1} parent=11 // pred_region
          %s275 = ssub.s32 512, 512
          %276 = vsyncadd [#allocation4], %s275
          %s277 = sshll.u32 [#allocation3], 4
          %s278 = int_to_ptr.vmem [resolvable:$true] %s277
          %283 = dma.hbm_to_vmem [thread:$0]  %s3, 512, %s278, [#allocation4], 128, 128, 8
        $region20: #{tpu_custom_call.1} parent=11 // pred_fallthru
          _
        // Predicated region
        $region21: #{tpu_custom_call.1} parent=11 // pred_check
          %p284 = pneg %p138
        $region22: #{tpu_custom_call.1} parent=11 // pred_check_branch
          %286 = sbr.rel (%p284) target = $region24
        $region23: #{tpu_custom_call.1} parent=11 // pred_region
          _
        $region24: #{tpu_custom_call.1} parent=11 // pred_fallthru
          _
        // Predicated region
        $region25: #{tpu_custom_call.1} parent=11 // pred_check
          %p287 = pneg %p159
        $region26: #{tpu_custom_call.1} parent=11 // pred_check_branch
          %289 = sbr.rel (%p287) target = $region28
        $region27: #{tpu_custom_call.1} parent=11 // pred_region
          _
        $region28: #{tpu_custom_call.1} parent=11 // pred_fallthru
          _
        // Predicated region
        $region29: #{tpu_custom_call.1} parent=11 // pred_check
          %p290 = pneg %p180
        $region30: #{tpu_custom_call.1} parent=11 // pred_check_branch
          %292 = sbr.rel (%p290) target = $region32
        $region31: #{tpu_custom_call.1} parent=11 // pred_region
          _
        $region32: #{tpu_custom_call.1} parent=11 // pred_fallthru
          _
        // Predicated region
        $region33: #{tpu_custom_call.1} parent=11 // pred_check
          %p293 = pneg %p201
        $region34: #{tpu_custom_call.1} parent=11 // pred_check_branch
          %295 = sbr.rel (%p293) target = $region36
        $region35: #{tpu_custom_call.1} parent=11 // pred_region
          _
        $region36: #{tpu_custom_call.1} parent=11 // pred_fallthru
          _
      $region12: #{tpu_custom_call.1} parent=5 // pred_fallthru
        _
      %p296 = scmp.lt.s32.totalorder %s23, 2
      // Predicated region
      $region37: #{tpu_custom_call.1} parent=5 // pred_check
        %p297 = pneg %p296
      $region38: #{tpu_custom_call.1} parent=5 // pred_check_branch
        %299 = sbr.rel (%p297) target = $region40
      $region39: #{tpu_custom_call.1} parent=5 // pred_region
        // Predicated region
        $region41: #{tpu_custom_call.1} parent=39 // pred_check
          %p300 = pneg %p43
        $region42: #{tpu_custom_call.1} parent=39 // pred_check_branch
          %302 = sbr.rel (%p300) target = $region44
        $region43: #{tpu_custom_call.1} parent=39 // pred_region
          %p303 = scmp.lt.s32.totalorder %s23, 1
          %s304 = scalar_select %p303, %s23, 1
          %s305 = smul.addr %s304, 4
          %s306 = scalar_lea.vmem %s0, %s305
        $region44: #{tpu_custom_call.1} parent=39 // pred_fallthru
          _
        // Predicated region
        $region45: #{tpu_custom_call.1} parent=39 // pred_check
          %p307 = pneg %p69
        $region46: #{tpu_custom_call.1} parent=39 // pred_check_branch
          %309 = sbr.rel (%p307) target = $region48
        $region47: #{tpu_custom_call.1} parent=39 // pred_region
          %s310 = sand.u32 %s59, 1
          %s311 = sand.u32 %s59, 1
          %s312 = smul.addr %s311, 32
          %s313 = scalar_lea.vmem [#allocation2], %s312
          %s314 = smul.addr %s23, 8
          %s315 = scalar_lea.vmem %s1, %s314
          // Predicated region
          $region49: #{tpu_custom_call.1} parent=47 // pred_check
            _
          $region50: #{tpu_custom_call.1} parent=47 // pred_check_branch
            %317 = sbr.rel (0) target = $region52
          $region51: #{tpu_custom_call.1} parent=47 // pred_region
            // Predicated region
            $region53: #{tpu_custom_call.1} parent=51 // pred_check
              _
            $region54: #{tpu_custom_call.1} parent=51 // pred_check_branch
              %319 = sbr.rel (0) target = $region56
            $region55: #{tpu_custom_call.1} parent=51 // pred_region
              // Predicated region
              $region68: #{tpu_custom_call.1} parent=55 // pred_check
                _
              $region69: #{tpu_custom_call.1} parent=55 // pred_check_branch
                %340 = sbr.rel (0) target = $region71
              $region70: #{tpu_custom_call.1} parent=55 // pred_region
                loop: start=0, step=1, limit=1
                $region72: #{tpu_custom_call.1} parent=70 // loop_pre_header
                  _
                $region73: #{tpu_custom_call.1} parent=70 // loop_header
                  %s342 = sphi 0, %s346
                  %p343 = scmp.ge.s32.totalorder %s342, 1
                  %s347 = sphi %s315, %s315
                  %s348 = sphi %s313, %s313
                $region74: #{tpu_custom_call.1} parent=70 // loop_header_branch
                  %345 = sbr.rel (%p343) target = $region78
                $region75: #{tpu_custom_call.1} parent=70 // loop_body
                  %v349 = vld [vmem:[%s347] sm:$0xff]
                  %350 = vst [vmem:[%s348] sm:$0xff] %v349
                  %v351 = vld [vmem:[%s347 + $0x10] sm:$0xff]
                  %352 = vst [vmem:[%s348 + $0x8] sm:$0xff] %v351
                  %v353 = vld [vmem:[%s347 + $0x20] sm:$0xff]
                  %354 = vst [vmem:[%s348 + $0x10] sm:$0xff] %v353
                  %v355 = vld [vmem:[%s347 + $0x30] sm:$0xff]
                  %356 = vst [vmem:[%s348 + $0x18] sm:$0xff] %v355
                $region76: #{tpu_custom_call.1} parent=70 // loop_footer
                  %s346 = sadd.s32 1, %s342
                $region77: #{tpu_custom_call.1} parent=70 // loop_footer_branch
                  %341 = sbr.rel target = $region73
                $region78: #{tpu_custom_call.1} parent=70 // loop_exit
                  _
              $region71: #{tpu_custom_call.1} parent=55 // pred_fallthru
                _
              // Predicated region
              $region79: #{tpu_custom_call.1} parent=55 // pred_check
                _
              $region80: #{tpu_custom_call.1} parent=55 // pred_check_branch
                %358 = sbr.rel target = $region82
              $region81: #{tpu_custom_call.1} parent=55 // pred_region
                _
              $region82: #{tpu_custom_call.1} parent=55 // pred_fallthru
                _
            $region56: #{tpu_custom_call.1} parent=51 // pred_fallthru
              _
            // Predicated region
            $region57: #{tpu_custom_call.1} parent=51 // pred_check
              _
            $region58: #{tpu_custom_call.1} parent=51 // pred_check_branch
              %321 = sbr.rel target = $region60
            $region59: #{tpu_custom_call.1} parent=51 // pred_region
              loop: start=0, step=1, limit=1
              $region61: #{tpu_custom_call.1} parent=59 // loop_pre_header
                _
              $region62: #{tpu_custom_call.1} parent=59 // loop_header
                %s324 = sphi 0, %s328
                %p325 = scmp.ge.s32.totalorder %s324, 1
                %s329 = sphi %s315, %s315
                %s330 = sphi %s313, %s313
              $region63: #{tpu_custom_call.1} parent=59 // loop_header_branch
                %327 = sbr.rel (%p325) target = $region67
              $region64: #{tpu_custom_call.1} parent=59 // loop_body
                %v331 = vld [vmem:[%s329] sm:$0xff]
                %332 = vst [vmem:[%s330] sm:$0xff] %v331
                %v333 = vld [vmem:[%s329 + $0x10] sm:$0xff]
                %334 = vst [vmem:[%s330 + $0x8] sm:$0xff] %v333
                %v335 = vld [vmem:[%s329 + $0x20] sm:$0xff]
                %336 = vst [vmem:[%s330 + $0x10] sm:$0xff] %v335
                %v337 = vld [vmem:[%s329 + $0x30] sm:$0xff]
                %338 = vst [vmem:[%s330 + $0x18] sm:$0xff] %v337
              $region65: #{tpu_custom_call.1} parent=59 // loop_footer
                %s328 = sadd.s32 1, %s324
              $region66: #{tpu_custom_call.1} parent=59 // loop_footer_branch
                %323 = sbr.rel target = $region62
              $region67: #{tpu_custom_call.1} parent=59 // loop_exit
                _
            $region60: #{tpu_custom_call.1} parent=51 // pred_fallthru
              _
          $region52: #{tpu_custom_call.1} parent=47 // pred_fallthru
            _
          %359 = vnop
        $region48: #{tpu_custom_call.1} parent=39 // pred_fallthru
          _
      $region40: #{tpu_custom_call.1} parent=5 // pred_fallthru
        _
      %p360 = scmp.le.s32.totalorder 1, %s23
      %p361 = scmp.lt.s32.totalorder %s23, 3
      %p362 = pnand %p360, %p361
      %p363 = pneg %p362
      // Predicated region
      $region83: #{tpu_custom_call.1} parent=5 // pred_check
        _
      $region84: #{tpu_custom_call.1} parent=5 // pred_check_branch
        %365 = sbr.rel (%p362) target = $region86
      $region85: #{tpu_custom_call.1} parent=5 // pred_region
        %s366 = ssub.s32 %s23, 1
        %s367 = sand.u32 %s62, 1
        %s368 = sand.u32 %s62, 1
        %s369 = smul.addr %s368, 32
        %s370 = scalar_lea.vmem [#allocation2], %s369
        // Predicated region
        $region87: #{tpu_custom_call.1} parent=85 // pred_check
          %p371 = pneg %p75
        $region88: #{tpu_custom_call.1} parent=85 // pred_check_branch
          %373 = sbr.rel (%p371) target = $region90
        $region89: #{tpu_custom_call.1} parent=85 // pred_region
          _
        $region90: #{tpu_custom_call.1} parent=85 // pred_fallthru
          _
        // Predicated region
        $region91: #{tpu_custom_call.1} parent=85 // pred_check
          %p374 = pneg %p117
        $region92: #{tpu_custom_call.1} parent=85 // pred_check_branch
          %376 = sbr.rel (%p374) target = $region94
        $region93: #{tpu_custom_call.1} parent=85 // pred_region
          %377 = dma.done [#allocation4], 512
        $region94: #{tpu_custom_call.1} parent=85 // pred_fallthru
          _
        %p378 = scmp.lt.s32.totalorder %s28, 1
        %s379 = scalar_select %p378, %s28, 1
        %s380 = smul.addr %s379, 4
        %s381 = scalar_lea.vmem %s0, %s380
        %p382 = pneg %p49
        %p383 = pneg %p46
        %s384 = sand.u32 %s62, 1
        %s385 = sand.u32 %s62, 1
        %s386 = smul.addr %s385, 32
        %s387 = scalar_lea.vmem [#allocation2], %s386
        %p388 = pneg %p75
        %p389 = pneg %p72
        %p390 = pneg %p96
        %p391 = pneg %p93
        %p392 = pneg %p117
        %p393 = pneg %p114
        %p394 = pneg %p138
        %p395 = pneg %p135
        %p396 = pneg %p159
        %p397 = pneg %p156
        %p398 = pneg %p180
        %p399 = pneg %p177
        %p400 = pneg %p201
        %p401 = pneg %p198
        %p402 = pneg %p227
        %p403 = pneg %p224
        %s404 = sand.u32 %s214, 1
        %s405 = scalar_lea.sflag [#allocation5], %s404
        %s406 = sand.u32 %s214, 1
        %s407 = smul.addr %s406, 4
        %s408 = scalar_lea.vmem [#allocation6], %s407
        %p409 = pneg %p253
        %p410 = pneg %p250
        %s411 = sand.u32 %s240, 1
        %s412 = scalar_lea.sflag [#allocation8], %s411
        %s413 = sand.u32 %s240, 1
        %s414 = scalar_lea.vmem [#allocation7], %s413
        %p415 = scmp.lt.s32.totalorder %s28, 1
        %s416 = scalar_select %p415, %s28, 1
        %s417 = smul.addr %s416, 4
        %s418 = scalar_lea.vmem %s0, %s417
        %v419 = vld [vmem:[%s418] sm:$0xf]
        %v420 = vld [vmem:[%s370] sm:$0xff]
        %v421 = vld [vmem:[%s370 + $0x8] sm:$0xff]
        %v422 = vld [vmem:[%s370 + $0x10] sm:$0xff]
        %v423 = vld [vmem:[%s370 + $0x18] sm:$0xff]
        %v424 = vld [vmem:[%s7] sm:$0xf]
        %v425 = vld [vmem:[%s2] sm:$0xff]
        %v426 = vld [vmem:[%s2 + $0x8] sm:$0xff]
        %v427 = vld [vmem:[%s2 + $0x10] sm:$0xff]
        %v428 = vld [vmem:[%s2 + $0x18] sm:$0xff]
        %v429 = vtanh.pop %v419
        %v430 = vld [vmem:[#allocation3] sm:$0xff]
        %v431 = vld [vmem:[#allocation3 + $0x8] sm:$0xff]
        %v432 = vld [vmem:[#allocation3 + $0x10] sm:$0xff]
        %v433 = vld [vmem:[#allocation3 + $0x18] sm:$0xff]
        %vm434 = vcmask 261120
        %v436 = vsel %vm434, %v430, 0
        %v439 = vsel %vm434, %v431, 0
        %v442 = vsel %vm434, %v432, 0
        %v445 = vsel %vm434, %v433, 0
        %447 = vmatprep.subr.mxu0 0.0
        %448 = vmatpush1.msra.mxu0 %v420
        %449 = vmatprep.subr.mxu0 0.0
        %450 = vmatpush1.msra.mxu0 %v421
        %451 = vmatprep.subr.mxu0 0.0
        %452 = vmatpush1.msra.mxu0 %v422
        %453 = vmatprep.subr.mxu0 0.0
        %454 = vmatpush1.msra.mxu0 %v423
        %455 = vmatprep.subr.mxu0 0.0
        %456 = vmatpush1.msra.mxu0 0.0
        %457 = vmatprep.subr.mxu0 0.0
        %458 = vmatpush1.msra.mxu0 0.0
        %459 = vmatprep.subr.mxu0 0.0
        %460 = vmatpush1.msra.mxu0 0.0
        %461 = vmatprep.subr.mxu0 0.0
        %462 = vmatpush1.msra.mxu0 0.0
        %463 = vmatprep.subr.mxu0 0.0
        %464 = vmatpush1.msra.mxu0 0.0
        %465 = vmatprep.subr.mxu0 0.0
        %466 = vmatpush1.msra.mxu0 0.0
        %467 = vmatprep.subr.mxu0 0.0
        %468 = vmatpush1.msra.mxu0 0.0
        %469 = vmatprep.subr.mxu0 0.0
        %470 = vmatpush1.msra.mxu0 0.0
        %471 = vmatprep.subr.mxu0 0.0
        %472 = vmatpush1.msra.mxu0 0.0
        %473 = vmatprep.subr.mxu0 0.0
        %474 = vmatpush1.msra.mxu0 0.0
        %475 = vmatprep.subr.mxu0 0.0
        %476 = vmatpush1.msra.mxu0 0.0
        %477 = vmatprep.subr.mxu0 0.0
        %478 = vmatpush1.msra.mxu0 0.0
        %479 = vmatprep.subr.mxu0 0.0
        %480 = vmatpush1.msra.mxu0 0.0
        %481 = vmatprep.subr.mxu0 0.0
        %482 = vmatpush1.msra.mxu0 0.0
        %483 = vmatprep.subr.mxu0 0.0
        %484 = vmatpush1.msra.mxu0 0.0
        %485 = vmatprep.subr.mxu0 0.0
        %486 = vmatpush1.msra.mxu0 0.0
        %487 = vmatprep.subr.mxu0 0.0
        %488 = vmatpush1.msra.mxu0 0.0
        %489 = vmatprep.subr.mxu0 0.0
        %490 = vmatpush1.msra.mxu0 0.0
        %491 = vmatprep.subr.mxu0 0.0
        %492 = vmatpush1.msra.mxu0 0.0
        %493 = vmatprep.subr.mxu0 0.0
        %494 = vmatpush1.msra.mxu0 0.0
        %495 = vmatprep.subr.mxu0 0.0
        %496 = vmatpush1.msra.mxu0 0.0
        %497 = vmatprep.subr.mxu0 0.0
        %498 = vmatpush1.msra.mxu0 0.0
        %499 = vmatprep.subr.mxu0 0.0
        %500 = vmatpush1.msra.mxu0 0.0
        %501 = vmatprep.subr.mxu0 0.0
        %502 = vmatpush1.msra.mxu0 0.0
        %503 = vmatprep.subr.mxu0 0.0
        %504 = vmatpush1.msra.mxu0 0.0
        %505 = vmatprep.subr.mxu0 0.0
        %506 = vmatpush1.msra.mxu0 0.0
        %507 = vmatprep.subr.mxu0 0.0
        %508 = vmatpush1.msra.mxu0 0.0
        %509 = vmatprep.subr.mxu0 0.0
        %510 = vmatpush1.msra.mxu0 0.0
        %511 = vmatprep.mubr.f32.mxu0 0.0
        %512 = vmatmul.mubr.f32.gmra.mrb[0].mxu0 %v436
        %v513 = vpop.f32.mrb[0].mxu0
        %v514 = vadd.f32 0.0, %v513
        %v515 = vpop.f32.mrb[0].mxu0
        %516 = vmatprep.mubr.f32.mxu0 0.0
        %517 = vmatmul.mubr.f32.gmra.mrb[0].mxu0 %v439
        %v518 = vpop.f32.mrb[0].mxu0
        %v519 = vadd.f32 0.0, %v518
        %v520 = vpop.f32.mrb[0].mxu0
        %521 = vmatprep.mubr.f32.mxu0 0.0
        %522 = vmatmul.mubr.f32.gmra.mrb[0].mxu0 %v442
        %v523 = vpop.f32.mrb[0].mxu0
        %v524 = vadd.f32 0.0, %v523
        %v525 = vpop.f32.mrb[0].mxu0
        %526 = vmatprep.mubr.f32.mxu0 0.0
        %527 = vmatmul.mubr.f32.gmra.mrb[0].mxu0 %v445
        %v528 = vpop.f32.mrb[0].mxu0
        %v529 = vadd.f32 0.0, %v528
        %v530 = vpop.f32.mrb[0].mxu0
        %531 = vdwg.mxu0
        %vm532 = vcmask 31744
        %v534 = vsel %vm532, %v425, 0
        %v537 = vsel %vm532, %v426, 0
        %v540 = vsel %vm532, %v427, 0
        %v543 = vsel %vm532, %v428, 0
        %vm545 = vcmask 1043456
        %v547 = vsel %vm545, %v429, 0
        %549 = vmatprep.subr.mxu0 0.0
        %550 = vmatpush1.msra.mxu0 %v547
        %551 = vmatprep.subr.mxu0 0.0
        %552 = vmatpush1.msra.mxu0 0.0
        %553 = vmatprep.subr.mxu0 0.0
        %554 = vmatpush1.msra.mxu0 0.0
        %555 = vmatprep.subr.mxu0 0.0
        %556 = vmatpush1.msra.mxu0 0.0
        %557 = vmatprep.subr.mxu0 0.0
        %558 = vmatpush1.msra.mxu0 0.0
        %559 = vmatprep.subr.mxu0 0.0
        %560 = vmatpush1.msra.mxu0 0.0
        %561 = vmatprep.subr.mxu0 0.0
        %562 = vmatpush1.msra.mxu0 0.0
        %563 = vmatprep.subr.mxu0 0.0
        %564 = vmatpush1.msra.mxu0 0.0
        %565 = vmatprep.subr.mxu0 0.0
        %566 = vmatpush1.msra.mxu0 0.0
        %567 = vmatprep.subr.mxu0 0.0
        %568 = vmatpush1.msra.mxu0 0.0
        %569 = vmatprep.subr.mxu0 0.0
        %570 = vmatpush1.msra.mxu0 0.0
        %571 = vmatprep.subr.mxu0 0.0
        %572 = vmatpush1.msra.mxu0 0.0
        %573 = vmatprep.subr.mxu0 0.0
        %574 = vmatpush1.msra.mxu0 0.0
        %575 = vmatprep.subr.mxu0 0.0
        %576 = vmatpush1.msra.mxu0 0.0
        %577 = vmatprep.subr.mxu0 0.0
        %578 = vmatpush1.msra.mxu0 0.0
        %579 = vmatprep.subr.mxu0 0.0
        %580 = vmatpush1.msra.mxu0 0.0
        %581 = vmatprep.subr.mxu0 0.0
        %582 = vmatpush1.msra.mxu0 0.0
        %583 = vmatprep.subr.mxu0 0.0
        %584 = vmatpush1.msra.mxu0 0.0
        %585 = vmatprep.subr.mxu0 0.0
        %586 = vmatpush1.msra.mxu0 0.0
        %587 = vmatprep.subr.mxu0 0.0
        %588 = vmatpush1.msra.mxu0 0.0
        %589 = vmatprep.subr.mxu0 0.0
        %590 = vmatpush1.msra.mxu0 0.0
        %591 = vmatprep.subr.mxu0 0.0
        %592 = vmatpush1.msra.mxu0 0.0
        %593 = vmatprep.subr.mxu0 0.0
        %594 = vmatpush1.msra.mxu0 0.0
        %595 = vmatprep.subr.mxu0 0.0
        %596 = vmatpush1.msra.mxu0 0.0
        %597 = vmatprep.subr.mxu0 0.0
        %598 = vmatpush1.msra.mxu0 0.0
        %599 = vmatprep.subr.mxu0 0.0
        %600 = vmatpush1.msra.mxu0 0.0
        %601 = vmatprep.subr.mxu0 0.0
        %602 = vmatpush1.msra.mxu0 0.0
        %603 = vmatprep.subr.mxu0 0.0
        %604 = vmatpush1.msra.mxu0 0.0
        %605 = vmatprep.subr.mxu0 0.0
        %606 = vmatpush1.msra.mxu0 0.0
        %607 = vmatprep.subr.mxu0 0.0
        %608 = vmatpush1.msra.mxu0 0.0
        %609 = vmatprep.subr.mxu0 0.0
        %610 = vmatpush1.msra.mxu0 0.0
        %611 = vmatprep.subr.mxu0 0.0
        %612 = vmatpush1.msra.mxu0 0.0
        %613 = vmatprep.mubr.f32.mxu0 0.0
        %614 = vmatmul.mubr.f32.gmra.mrb[0].mxu0 %v534
        %v615 = vpop.f32.mrb[0].mxu0
        %v616 = vadd.f32 %v514, %v615
        %v617 = vpop.f32.mrb[0].mxu0
        %618 = vmatprep.mubr.f32.mxu0 0.0
        %619 = vmatmul.mubr.f32.gmra.mrb[0].mxu0 %v537
        %v620 = vpop.f32.mrb[0].mxu0
        %v621 = vadd.f32 %v519, %v620
        %v622 = vpop.f32.mrb[0].mxu0
        %623 = vmatprep.mubr.f32.mxu0 0.0
        %624 = vmatmul.mubr.f32.gmra.mrb[0].mxu0 %v540
        %v625 = vpop.f32.mrb[0].mxu0
        %v626 = vadd.f32 %v524, %v625
        %v627 = vpop.f32.mrb[0].mxu0
        %628 = vmatprep.mubr.f32.mxu0 0.0
        %629 = vmatmul.mubr.f32.gmra.mrb[0].mxu0 %v543
        %v630 = vpop.f32.mrb[0].mxu0
        %v631 = vadd.f32 %v529, %v630
        %v632 = vpop.f32.mrb[0].mxu0
        %633 = vdwg.mxu0
        %v634 = vld [vmem:[%s4] sm:$0xff]
        %v635 = vld [vmem:[%s4 + $0x8] sm:$0xff]
        %v636 = vld [vmem:[%s4 + $0x10] sm:$0xff]
        %v637 = vld [vmem:[%s4 + $0x18] sm:$0xff]
        %639 = vset.pattern.permute.xlu0 0
        %640 = vperm.xlu0 %639, %v634
        %v641 = vpop.permute.xlu0 %640
        %644 = vset.pattern.permute.xlu0 0
        %645 = vperm.xlu0 %644, %v635
        %v646 = vpop.permute.xlu0 %645
        %649 = vset.pattern.permute.xlu0 0
        %650 = vperm.xlu0 %649, %v636
        %v651 = vpop.permute.xlu0 %650
        %654 = vset.pattern.permute.xlu0 0
        %655 = vperm.xlu0 %654, %v637
        %v656 = vpop.permute.xlu0 %655
        %v658 = vadd.f32 %v616, %v641
        %v659 = vadd.f32 %v621, %v646
        %v660 = vadd.f32 %v626, %v651
        %v661 = vadd.f32 %v631, %v656
        %v662 = vmax.f32 %v658, 0.0
        %v663 = vmax.f32 %v659, 0.0
        %v664 = vmax.f32 %v660, 0.0
        %v665 = vmax.f32 %v661, 0.0
        %v666 = vld [vmem:[%s5] sm:$0x3]
        %v667 = vld [vmem:[%s6] sm:$0x3]
        %669 = vset.pattern.permute.xlu0 0
        %670 = vperm.xlu0 %669, %v667
        %v671 = vpop.permute.xlu0 %670
        %v674 = vsel %vm434, %v666, 0
        %676 = vmatprep.subr.mxu0 0.0
        %677 = vmatpush1.msra.mxu0 %v662
        %678 = vmatprep.subr.mxu0 0.0
        %679 = vmatpush1.msra.mxu0 %v663
        %680 = vmatprep.subr.mxu0 0.0
        %681 = vmatpush1.msra.mxu0 %v664
        %682 = vmatprep.subr.mxu0 0.0
        %683 = vmatpush1.msra.mxu0 %v665
        %684 = vmatprep.subr.mxu0 0.0
        %685 = vmatpush1.msra.mxu0 0.0
        %686 = vmatprep.subr.mxu0 0.0
        %687 = vmatpush1.msra.mxu0 0.0
        %688 = vmatprep.subr.mxu0 0.0
        %689 = vmatpush1.msra.mxu0 0.0
        %690 = vmatprep.subr.mxu0 0.0
        %691 = vmatpush1.msra.mxu0 0.0
        %692 = vmatprep.subr.mxu0 0.0
        %693 = vmatpush1.msra.mxu0 0.0
        %694 = vmatprep.subr.mxu0 0.0
        %695 = vmatpush1.msra.mxu0 0.0
        %696 = vmatprep.subr.mxu0 0.0
        %697 = vmatpush1.msra.mxu0 0.0
        %698 = vmatprep.subr.mxu0 0.0
        %699 = vmatpush1.msra.mxu0 0.0
        %700 = vmatprep.subr.mxu0 0.0
        %701 = vmatpush1.msra.mxu0 0.0
        %702 = vmatprep.subr.mxu0 0.0
        %703 = vmatpush1.msra.mxu0 0.0
        %704 = vmatprep.subr.mxu0 0.0
        %705 = vmatpush1.msra.mxu0 0.0
        %706 = vmatprep.subr.mxu0 0.0
        %707 = vmatpush1.msra.mxu0 0.0
        %708 = vmatprep.subr.mxu0 0.0
        %709 = vmatpush1.msra.mxu0 0.0
        %710 = vmatprep.subr.mxu0 0.0
        %711 = vmatpush1.msra.mxu0 0.0
        %712 = vmatprep.subr.mxu0 0.0
        %713 = vmatpush1.msra.mxu0 0.0
        %714 = vmatprep.subr.mxu0 0.0
        %715 = vmatpush1.msra.mxu0 0.0
        %716 = vmatprep.subr.mxu0 0.0
        %717 = vmatpush1.msra.mxu0 0.0
        %718 = vmatprep.subr.mxu0 0.0
        %719 = vmatpush1.msra.mxu0 0.0
        %720 = vmatprep.subr.mxu0 0.0
        %721 = vmatpush1.msra.mxu0 0.0
        %722 = vmatprep.subr.mxu0 0.0
        %723 = vmatpush1.msra.mxu0 0.0
        %724 = vmatprep.subr.mxu0 0.0
        %725 = vmatpush1.msra.mxu0 0.0
        %726 = vmatprep.subr.mxu0 0.0
        %727 = vmatpush1.msra.mxu0 0.0
        %728 = vmatprep.subr.mxu0 0.0
        %729 = vmatpush1.msra.mxu0 0.0
        %730 = vmatprep.subr.mxu0 0.0
        %731 = vmatpush1.msra.mxu0 0.0
        %732 = vmatprep.subr.mxu0 0.0
        %733 = vmatpush1.msra.mxu0 0.0
        %734 = vmatprep.subr.mxu0 0.0
        %735 = vmatpush1.msra.mxu0 0.0
        %736 = vmatprep.subr.mxu0 0.0
        %737 = vmatpush1.msra.mxu0 0.0
        %738 = vmatprep.subr.mxu0 0.0
        %739 = vmatpush1.msra.mxu0 0.0
        %740 = vmatprep.mubr.f32.mxu0 0.0
        %741 = vmatmul.mubr.f32.gmra.mrb[0].mxu0 %v674
        %v742 = vpop.f32.mrb[0].mxu0
        %v743 = vadd.f32 %v671, %v742
        %v744 = vpop.f32.mrb[0].mxu0
        %745 = vdwg.mxu0
        %v746 = vxor.u32 %v743, 2147483648
        %v747 = vmul.f32 %v746, 1.442695
        %v748 = vpow.pop %v747
        %v749 = vadd.f32 %v748, 1.0
        %v750 = vrcp.pop %v749
        %v751 = vmul.f32 1.0, %v750
        %v752 = vmul.f32 %v751, 5.0
        %v753 = vadd.f32 %v752, 0.005
        %v754 = vmul.f32 %v751, 6.0
        %v755 = vsub.f32 %v754, 3.0
        %v756 = vrcp.pop %v753
        %758 = vset.pattern.permute.xlu0 0
        %759 = vperm.xlu0 %758, %v424
        %v760 = vpop.permute.xlu0 %759
        %v762 = vmul.f32 %v760, %v419
        %v763 = vsub.f32 1.0, %v424
        %v764 = vlaneseq
        %v765 = vshrl.u32 %v764, 7
        %v766 = vsub.s32 1, %v765
        %v767 = vrot.slane %v755, %v766
        %v768 = vsub.f32 %v419, %v767
        %v769 = vlaneseq
        %v770 = vshrl.u32 %v769, 7
        %v771 = vsub.s32 0, %v770
        %v772 = vrot.slane %v756, %v771
        %v773 = vmul.f32 %v768, %v772
        %775 = vset.pattern.permute.xlu0 0
        %776 = vperm.xlu0 %775, %v763
        %v777 = vpop.permute.xlu0 %776
        %v779 = vmul.f32 %v777, %v773
        %v780 = vadd.f32 %v762, %v779
        %781 = vst [vmem:[%s408] sm:$0xf] %v780
        %v782 = vsub.f32 0.0, %v753
        %783 = vst [vmem:[%s414] sm:$0x1] %v782
        %s784 = sand.u32 %s214, 1
        %s785 = scalar_lea.sflag [#allocation5], %s784
        %s786 = sand.u32 %s214, 1
        %s787 = smul.addr %s786, 4
        %s788 = scalar_lea.vmem [#allocation6], %s787
        %s789 = sand.u32 %s240, 1
        %s790 = scalar_lea.sflag [#allocation8], %s789
        %s791 = sand.u32 %s240, 1
        %s792 = scalar_lea.vmem [#allocation7], %s791
        // Predicated region
        $region95: #{tpu_custom_call.1} parent=85 // pred_check
          %p793 = pneg %p224
        $region96: #{tpu_custom_call.1} parent=85 // pred_check_branch
          %795 = sbr.rel (%p793) target = $region98
        $region97: #{tpu_custom_call.1} parent=85 // pred_region
          %s797 = ssub.s32 64, 64
          %798 = vsyncadd %s785, %s797
          %s799 = smul.addr %s28, 64
          %s800 = scalar_lea.hbm %s8, %s799
          %s802 = sshll.u32 %s788, 4
          %s803 = int_to_ptr.vmem [resolvable:$true] %s802
          %805 = dma.vmem_to_hbm [thread:$0]  %s803, 64, %s800, %s785
        $region98: #{tpu_custom_call.1} parent=85 // pred_fallthru
          _
        // Predicated region
        $region99: #{tpu_custom_call.1} parent=85 // pred_check
          %p806 = pneg %p250
        $region100: #{tpu_custom_call.1} parent=85 // pred_check_branch
          %808 = sbr.rel (%p806) target = $region102
        $region101: #{tpu_custom_call.1} parent=85 // pred_region
          %s810 = ssub.s32 16, 16
          %811 = vsyncadd %s790, %s810
          %s812 = smul.addr %s28, 16
          %s813 = scalar_lea.hbm %s9, %s812
          %s815 = sshll.u32 %s792, 4
          %s816 = int_to_ptr.vmem [resolvable:$true] %s815
          %818 = dma.vmem_to_hbm [thread:$0]  %s816, 16, %s813, %s790
        $region102: #{tpu_custom_call.1} parent=85 // pred_fallthru
          _
      $region86: #{tpu_custom_call.1} parent=5 // pred_fallthru
        _
      %p819 = scmp.le.s32.totalorder 2, %s23
      // Predicated region
      $region103: #{tpu_custom_call.1} parent=5 // pred_check
        %p820 = pneg %p819
      $region104: #{tpu_custom_call.1} parent=5 // pred_check_branch
        %822 = sbr.rel (%p820) target = $region106
      $region105: #{tpu_custom_call.1} parent=5 // pred_region
        %s823 = ssub.s32 %s23, 2
        // Predicated region
        $region107: #{tpu_custom_call.1} parent=105 // pred_check
          %p824 = pneg %p230
        $region108: #{tpu_custom_call.1} parent=105 // pred_check_branch
          %826 = sbr.rel (%p824) target = $region110
        $region109: #{tpu_custom_call.1} parent=105 // pred_region
          %s827 = sand.u32 %s215, 1
          %s828 = scalar_lea.sflag [#allocation5], %s827
          %s829 = sand.u32 %s215, 1
          %s830 = smul.addr %s829, 4
          %s831 = scalar_lea.vmem [#allocation6], %s830
          %832 = dma.done %s828, 64
        $region110: #{tpu_custom_call.1} parent=105 // pred_fallthru
          _
        // Predicated region
        $region111: #{tpu_custom_call.1} parent=105 // pred_check
          %p833 = pneg %p256
        $region112: #{tpu_custom_call.1} parent=105 // pred_check_branch
          %835 = sbr.rel (%p833) target = $region114
        $region113: #{tpu_custom_call.1} parent=105 // pred_region
          %s836 = sand.u32 %s241, 1
          %s837 = scalar_lea.sflag [#allocation8], %s836
          %s838 = sand.u32 %s241, 1
          %s839 = scalar_lea.vmem [#allocation7], %s838
          %840 = dma.done %s837, 16
        $region114: #{tpu_custom_call.1} parent=105 // pred_fallthru
          _
      $region106: #{tpu_custom_call.1} parent=5 // pred_fallthru
        _
    $region6: #{tpu_custom_call.1} parent=1 // loop_footer
      %s27 = sadd.s32 1, %s23
    $region7: #{tpu_custom_call.1} parent=1 // loop_footer_branch
      %22 = sbr.rel target = $region3
    $region8: #{tpu_custom_call.1} parent=1 // loop_exit
      _
    %841 = vsyncpa [#allocation4], 1
    %s842 = scalar_lea.sflag [#allocation4], 1
    %843 = vsyncpa %s842, 1
    %844 = vsyncpa [#allocation5], 1
    %s845 = scalar_lea.sflag [#allocation5], 1
    %846 = vsyncpa %s845, 1
    %847 = vsyncpa [#allocation8], 1
    %s848 = scalar_lea.sflag [#allocation8], 1
    %849 = vsyncpa %s848, 1

</llo_original>
